<compile_context>
chip_gen: v6e
topology: v6e:2x2x1
jax: 0.10.0
libtpu: 0.0.40
codegen_flags: <defaults>
</compile_context>

<pallas_src>
import jax
import jax.numpy as jnp
from jax.experimental import pallas as pl
from jax.experimental.pallas import tpu as pltpu


def _round_up(n: int, m: int) -> int:
    return pl.cdiv(n, m) * m


def _vmem_limit_bytes(TB: int, D: int) -> int:
    """Rough scoped-VMEM budget for one batch tile (with headroom)."""
    per_row = (
        2 * D * 4        # double-buffered streamed f32 x tile
        + 256 * 2        # in-kernel bf16 copy of x (lane-padded to 256)
        + 128 * 4        # h (f32)
        + 128 * 2        # h (bf16)
        + 128 * 4        # fc2 logits (f32)
        + 4 * 32         # sliced logits / softmax temporaries
        + 2 * 8 * 4      # double-buffered narrow output tile
    )
    est = int(per_row * TB * 1.5) + (2 << 20)       # + resident weights + slack
    # Keep above v5e's 16 MiB default scoped limit, below v7x's 64 MiB physical.
    return max(16 * 1024 * 1024, min(est, 48 * 1024 * 1024))


def tetris_brain_kernel(x_ref, w1_ref, b1_ref, w2_ref, b2_ref, o_ref):
    n_out = o_ref.shape[-1]  # 7 real classes

    # fc1: cast the streamed f32 board tile to bf16 for the MXU; f32 accumulate.
    x = x_ref[...].astype(jnp.bfloat16)
    h = jnp.dot(x, w1_ref[...], preferred_element_type=jnp.float32)
    h = jnp.maximum(h + b1_ref[...], 0.0)

    # fc2: bf16 x bf16 on the MXU (lane-dense 128-wide), f32 accumulate.  Keep
    # only the 7 real logit columns, so no masking of padded columns is needed.
    logits = jnp.dot(h.astype(jnp.bfloat16), w2_ref[...],
                     preferred_element_type=jnp.float32)
    logits = logits[:, :n_out] + b2_ref[...]

    # Softmax over the 7 real classes, f32 throughout, exact divide (the kernel
    # is DMA-bound, so the exact EUP reciprocal path is free).
    m = jnp.max(logits, axis=-1, keepdims=True)
    e = jnp.exp(logits - m)
    denom = jnp.sum(e, axis=-1, keepdims=True)
    o_ref[...] = (e / denom).astype(o_ref.dtype)


def tetris_brain_forward(x, w1, b1, w2, b2, *, block_b=4096):
    """x: [B, width*height] float32.  Returns [B, 7] softmax probabilities.

    w1: [D, 16], b1: [16], w2: [16, 7], b2: [7]  (nn.Linear weights transposed).
    """
    B, D = x.shape
    H = w1.shape[1]          # 16
    O = w2.shape[1]          # 7

    Hp = _round_up(H, 128)   # 16 -> 128  (lane-dense hidden)
    Wp = _round_up(O, 128)   # fc2 matmul runs 128-wide; sliced to O in-kernel

    # Weights are tiny (<100 KiB): pad/cast once per call, negligible vs x stream.
    w1_p = jnp.zeros((D, Hp), jnp.bfloat16).at[:, :H].set(w1.astype(jnp.bfloat16))
    b1_p = jnp.zeros((1, Hp), jnp.float32).at[:, :H].set(b1.reshape(1, H))
    w2_p = jnp.zeros((Hp, Wp), jnp.bfloat16).at[:H, :O].set(w2.astype(jnp.bfloat16))
    b2_p = b2.reshape(1, O).astype(jnp.float32)

    # Batch tile: multiple of 8 (legal block even if > B; ragged blocks are
    # masked by Pallas).  Prefer >=2 tiles for large batches so
    # dimension_semantics=("parallel",) can shard across both v7x TensorCores.
    TB = min(_round_up(block_b, 8), _round_up(B, 8))
    if B > 256 and pl.cdiv(B, TB) < 2:
        TB = _round_up(pl.cdiv(B, 2), 8)
    grid = (pl.cdiv(B, TB),)

    return pl.pallas_call(
        tetris_brain_kernel,
        out_shape=jax.ShapeDtypeStruct((B, O), jnp.float32),
        grid_spec=pltpu.PrefetchScalarGridSpec(
            num_scalar_prefetch=0,
            grid=grid,
            in_specs=[
                pl.BlockSpec((TB, D), lambda i: (i, 0)),    # streamed f32 board tile
                pl.BlockSpec((D, Hp), lambda i: (0, 0)),    # resident weights
                pl.BlockSpec((1, Hp), lambda i: (0, 0)),
                pl.BlockSpec((Hp, Wp), lambda i: (0, 0)),
                pl.BlockSpec((1, O), lambda i: (0, 0)),
            ],
            out_specs=pl.BlockSpec((TB, O), lambda i: (i, 0)),
        ),
        compiler_params=pltpu.CompilerParams(
            dimension_semantics=("parallel",),
            vmem_limit_bytes=_vmem_limit_bytes(TB, D),
        ),
    )(x, w1_p, b1_p, w2_p, b2_p)


def init_params(key, width=10, height=20):
    """Deterministic init mimicking nn.Linear's U(-1/sqrt(fan_in), 1/sqrt(fan_in))."""
    d_in = width * height
    k1, k2, k3, k4 = jax.random.split(key, 4)
    bound1 = 1.0 / jnp.sqrt(jnp.float32(d_in))
    bound2 = 1.0 / jnp.sqrt(jnp.float32(16))
    w1 = jax.random.uniform(k1, (d_in, 16), jnp.float32, -bound1, bound1)
    b1 = jax.random.uniform(k2, (16,), jnp.float32, -bound1, bound1)
    w2 = jax.random.uniform(k3, (16, 7), jnp.float32, -bound2, bound2)
    b2 = jax.random.uniform(k4, (7,), jnp.float32, -bound2, bound2)
    return w1, b1, w2, b2


def _reference(x, w1, b1, w2, b2):
    h = jnp.maximum(x @ w1 + b1, 0.0)
    logits = h @ w2 + b2
    return jax.nn.softmax(logits, axis=1)


if __name__ == "__main__":
    width, height = 10, 20
    key = jax.random.PRNGKey(0)
    kx, kp, kx2 = jax.random.split(key, 3)
    w1, b1, w2, b2 = init_params(kp, width, height)

    # --- Small case (module's nominal shapes): batch = 2 -------------------
    batch = 2
    x = jax.random.normal(kx, (batch, width * height), jnp.float32)
    out = tetris_brain_forward(x, w1, b1, w2, b2)
    out = jax.block_until_ready(out)

    ref = _reference(x, w1, b1, w2, b2)
    assert out.shape == (batch, 7)
    # bf16 MXU inputs -> slightly looser tolerance; softmax divide is exact.
    assert jnp.allclose(out, ref, atol=5e-3, rtol=0.0)
    assert jnp.allclose(jnp.sum(out, axis=1), 1.0, atol=1e-3)

    # --- Multi-tile case: exercises the batch grid + ragged last block -----
    batch2 = 300
    x2 = jax.random.normal(kx2, (batch2, width * height), jnp.float32)
    out2 = tetris_brain_forward(x2, w1, b1, w2, b2, block_b=128)  # grid = (3,)
    out2 = jax.block_until_ready(out2)

    ref2 = _reference(x2, w1, b1, w2, b2)
    assert out2.shape == (batch2, 7)
    assert jnp.allclose(out2, ref2, atol=5e-3, rtol=0.0)
    assert jnp.allclose(jnp.sum(out2, axis=1), 1.0, atol=1e-3)

    print("KERNEL_OK")
</pallas_src>

<mosaic_0001>
module attributes {stable_mosaic.version = 11 : i64} {
  func.func @tetris_brain_kernel(%arg0: i32, %arg1: memref<8x200xf32, #tpu.memory_space<vmem>>, %arg2: memref<200x128xbf16, #tpu.memory_space<vmem>>, %arg3: memref<1x128xf32, #tpu.memory_space<vmem>>, %arg4: memref<128x128xbf16, #tpu.memory_space<vmem>>, %arg5: memref<1x7xf32, #tpu.memory_space<vmem>>, %arg6: memref<8x7xf32, #tpu.memory_space<vmem>>) attributes {dimension_semantics = [#tpu.dimension_semantics<parallel>], iteration_bounds = array<i64: 1>, scalar_prefetch = 0 : i64, scratch_operands = 0 : i64, tpu.core_type = #tpu.core_type<tc>, window_params = [{transform_indices = @transform_0, window_bounds = array<i64: 8, 200>}, {pipeline_mode = #tpu.pipeline_mode<synchronous>, transform_indices = @transform_1, window_bounds = array<i64: 200, 128>}, {pipeline_mode = #tpu.pipeline_mode<synchronous>, transform_indices = @transform_2, window_bounds = array<i64: 1, 128>}, {pipeline_mode = #tpu.pipeline_mode<synchronous>, transform_indices = @transform_3, window_bounds = array<i64: 128, 128>}, {pipeline_mode = #tpu.pipeline_mode<synchronous>, transform_indices = @transform_4, window_bounds = array<i64: 1, 7>}, {transform_indices = @transform_5, window_bounds = array<i64: 8, 7>}]} {
    %c0 = arith.constant 0 : index
    %c0_0 = arith.constant 0 : index
    %0 = vector.load %arg1[%c0, %c0_0] : memref<8x200xf32, #tpu.memory_space<vmem>>, vector<8x200xf32>
    %1 = arith.truncf %0 : vector<8x200xf32> to vector<8x200xbf16>
    %c0_1 = arith.constant 0 : index
    %c0_2 = arith.constant 0 : index
    %2 = vector.load %arg2[%c0_1, %c0_2] : memref<200x128xbf16, #tpu.memory_space<vmem>>, vector<200x128xbf16>
    %cst = arith.constant dense<0.000000e+00> : vector<8x128xf32>
    %3 = tpu.matmul %1, %2, %cst {dimension_numbers = #tpu.dot_dimension_numbers<[1], [0], [0], [1], [0, 0, 1, 1], [], []>} : vector<8x200xbf16>, vector<200x128xbf16>, vector<8x128xf32> -> vector<8x128xf32>
    %c0_3 = arith.constant 0 : index
    %c0_4 = arith.constant 0 : index
    %4 = vector.load %arg3[%c0_3, %c0_4] : memref<1x128xf32, #tpu.memory_space<vmem>>, vector<1x128xf32>
    %5 = vector.broadcast %4 : vector<1x128xf32> to vector<8x128xf32>
    %6 = arith.addf %3, %5 : vector<8x128xf32>
    %cst_5 = arith.constant 0.000000e+00 : f32
    %7 = vector.broadcast %cst_5 : f32 to vector<8x128xf32>
    %8 = arith.maximumf %6, %7 : vector<8x128xf32>
    %9 = arith.truncf %8 : vector<8x128xf32> to vector<8x128xbf16>
    %c0_6 = arith.constant 0 : index
    %c0_7 = arith.constant 0 : index
    %10 = vector.load %arg4[%c0_6, %c0_7] : memref<128x128xbf16, #tpu.memory_space<vmem>>, vector<128x128xbf16>
    %cst_8 = arith.constant dense<0.000000e+00> : vector<8x128xf32>
    %11 = tpu.matmul %9, %10, %cst_8 {dimension_numbers = #tpu.dot_dimension_numbers<[1], [0], [0], [1], [0, 0, 1, 1], [], []>} : vector<8x128xbf16>, vector<128x128xbf16>, vector<8x128xf32> -> vector<8x128xf32>
    %12 = vector.extract_strided_slice %11 {offsets = [0, 0], sizes = [8, 7], strides = [1, 1]} : vector<8x128xf32> to vector<8x7xf32>
    %c0_9 = arith.constant 0 : index
    %c0_10 = arith.constant 0 : index
    %13 = vector.load %arg5[%c0_9, %c0_10] : memref<1x7xf32, #tpu.memory_space<vmem>>, vector<1x7xf32>
    %14 = vector.broadcast %13 : vector<1x7xf32> to vector<8x7xf32>
    %15 = arith.addf %12, %14 : vector<8x7xf32>
    %cst_11 = arith.constant dense<0xFF800000> : vector<8xf32>
    %16 = vector.multi_reduction <maximumf>, %15, %cst_11 [1] : vector<8x7xf32> to vector<8xf32>
    %17 = vector.shape_cast %16 : vector<8xf32> to vector<8x1xf32>
    %18 = vector.broadcast %17 : vector<8x1xf32> to vector<8x7xf32>
    %19 = arith.subf %15, %18 : vector<8x7xf32>
    %20 = math.exp %19 : vector<8x7xf32>
    %cst_12 = arith.constant dense<0.000000e+00> : vector<8xf32>
    %21 = vector.multi_reduction <add>, %20, %cst_12 [1] : vector<8x7xf32> to vector<8xf32>
    %22 = vector.shape_cast %21 : vector<8xf32> to vector<8x1xf32>
    %23 = vector.broadcast %22 : vector<8x1xf32> to vector<8x7xf32>
    %24 = arith.divf %20, %23 : vector<8x7xf32>
    %c0_13 = arith.constant 0 : index
    %c0_14 = arith.constant 0 : index
    %25 = vector.load %arg6[%c0_13, %c0_14] : memref<8x7xf32, #tpu.memory_space<vmem>>, vector<8x7xf32>
    tpu.vector_store %arg6[%c0_13, %c0_14], %24 {strides = array<i32>} : memref<8x7xf32, #tpu.memory_space<vmem>>, vector<8x7xf32>,
    return
  }
  func.func @transform_0(%arg0: i32) -> (i32, i32) {
    %c0_i32 = arith.constant 0 : i32
    %c0_i32_0 = arith.constant 0 : i32
    return %arg0, %c0_i32 : i32, i32
  }
  func.func @transform_1(%arg0: i32) -> (i32, i32) {
    %c0_i32 = arith.constant 0 : i32
    %c0_i32_0 = arith.constant 0 : i32
    %c0_i32_1 = arith.constant 0 : i32
    return %c0_i32, %c0_i32_0 : i32, i32
  }
  func.func @transform_2(%arg0: i32) -> (i32, i32) {
    %c0_i32 = arith.constant 0 : i32
    %c0_i32_0 = arith.constant 0 : i32
    %c0_i32_1 = arith.constant 0 : i32
    return %c0_i32, %c0_i32_0 : i32, i32
  }
  func.func @transform_3(%arg0: i32) -> (i32, i32) {
    %c0_i32 = arith.constant 0 : i32
    %c0_i32_0 = arith.constant 0 : i32
    %c0_i32_1 = arith.constant 0 : i32
    return %c0_i32, %c0_i32_0 : i32, i32
  }
  func.func @transform_4(%arg0: i32) -> (i32, i32) {
    %c0_i32 = arith.constant 0 : i32
    %c0_i32_0 = arith.constant 0 : i32
    %c0_i32_1 = arith.constant 0 : i32
    return %c0_i32, %c0_i32_0 : i32, i32
  }
  func.func @transform_5(%arg0: i32) -> (i32, i32) {
    %c0_i32 = arith.constant 0 : i32
    %c0_i32_0 = arith.constant 0 : i32
    return %arg0, %c0_i32 : i32, i32
  }
}

</mosaic_0001>

<llo_original>
// kernel: tpu_custom_call.1
$region0: #{tpu_custom_call.1}
  #allocation0 [shape = 'u32[]', space=smem, size = 0x4, offset = 0x4, fixed_abs, tag = 'smem constant byte address 0x4 - core index']
  #allocation1 [shape = 'u32[144,128]{1,0:T(1,128)}', space=vmem, size = 0x12000, scoped, tag = 'internal scratch']
  %s0 = inlined_call_operand.hbm [shape: f32[2,200], index: 0, kind: input, shape index: {}]
  %s1 = inlined_call_operand.hbm [shape: bf16[200,128], index: 1, kind: input, shape index: {}]
  %s2 = inlined_call_operand.vmem [shape: f32[1,128], index: 2, kind: input, shape index: {}]
  %s3 = inlined_call_operand.hbm [shape: bf16[128,128], index: 3, kind: input, shape index: {}]
  %s4 = inlined_call_operand.vmem [shape: f32[1,7], index: 4, kind: input, shape index: {}]
  %s5 = inlined_call_operand.hbm [shape: f32[2,7], index: 5, kind: output, shape index: {}]
  %s6 = sld [smem:[#allocation0]]
  $region42: #{tpu_custom_call.1} parent=0
    _
  %s8 = ssub.s32 1, %s6
  %s9 = scalar_select 0, %s8, %s6
  $region1: #{tpu_custom_call.1} parent=0
    #allocation2 [shape = 'u8[8192]{0}', space=vmem, size = 0x2000, scoped, tag = 'input window, operand 0, single buffered']
    #allocation3 [shape = 's32[1]{0}', space=sflag, size = 0x4, scoped, tag = 'scoped memory for tpu_custom_call.1']
    #allocation4 [shape = 's32[1]{0}', space=sflag, size = 0x4, scoped, tag = 'scoped memory for tpu_custom_call.1']
    #allocation5 [shape = 'u8[51200]{0}', space=vmem, size = 0xc800, scoped, tag = 'input window, operand 1, single buffered']
    #allocation6 [shape = 's32[1]{0}', space=sflag, size = 0x4, scoped, tag = 'scoped memory for tpu_custom_call.1']
    #allocation7 [shape = 'u8[32768]{0}', space=vmem, size = 0x8000, scoped, tag = 'input window, operand 3, single buffered']
    #allocation8 [shape = 'u8[4096]{0}', space=vmem, size = 0x1000, scoped, tag = 'output window, operand 0, single buffered']
    %10 = vsyncpa [#allocation3], 0
    %11 = vsyncpa [#allocation6], 0
    %12 = vsyncpa [#allocation4], 0
    // Predicated region
    $region2: #{tpu_custom_call.1} parent=1 // pred_check
      _
    $region3: #{tpu_custom_call.1} parent=1 // pred_check_branch
      %14 = sbr.rel (0) target = $region5
    $region4: #{tpu_custom_call.1} parent=1 // pred_region
      %s16 = ssub.s32 256, 64
      %17 = vsyncadd [#allocation3], %s16
      %s18 = sshll.u32 [#allocation2], 4
      %s19 = int_to_ptr.vmem [resolvable:$true] %s18
      %24 = dma.hbm_to_vmem [thread:$0]  %s0, 64, %s19, [#allocation3], 64, 64, 4
    $region5: #{tpu_custom_call.1} parent=1 // pred_fallthru
      _
    // Predicated region
    $region6: #{tpu_custom_call.1} parent=1 // pred_check
      _
    $region7: #{tpu_custom_call.1} parent=1 // pred_check_branch
      %26 = sbr.rel (0) target = $region9
    $region8: #{tpu_custom_call.1} parent=1 // pred_region
      %s28 = ssub.s32 1600, 1600
      %29 = vsyncadd [#allocation6], %s28
      %s30 = sshll.u32 [#allocation5], 4
      %s31 = int_to_ptr.vmem [resolvable:$true] %s30
      %36 = dma.hbm_to_vmem [thread:$0]  %s1, 1600, %s31, [#allocation6], 64, 64, 4
    $region9: #{tpu_custom_call.1} parent=1 // pred_fallthru
      _
    // Predicated region
    $region10: #{tpu_custom_call.1} parent=1 // pred_check
      _
    $region11: #{tpu_custom_call.1} parent=1 // pred_check_branch
      %38 = sbr.rel (0) target = $region13
    $region12: #{tpu_custom_call.1} parent=1 // pred_region
      _
    $region13: #{tpu_custom_call.1} parent=1 // pred_fallthru
      _
    // Predicated region
    $region14: #{tpu_custom_call.1} parent=1 // pred_check
      _
    $region15: #{tpu_custom_call.1} parent=1 // pred_check_branch
      %40 = sbr.rel (0) target = $region17
    $region16: #{tpu_custom_call.1} parent=1 // pred_region
      %s42 = ssub.s32 1024, 1024
      %43 = vsyncadd [#allocation6], %s42
      %s44 = sshll.u32 [#allocation7], 4
      %s45 = int_to_ptr.vmem [resolvable:$true] %s44
      %50 = dma.hbm_to_vmem [thread:$0]  %s3, 1024, %s45, [#allocation6], 64, 64, 4
    $region17: #{tpu_custom_call.1} parent=1 // pred_fallthru
      _
    // Predicated region
    $region18: #{tpu_custom_call.1} parent=1 // pred_check
      _
    $region19: #{tpu_custom_call.1} parent=1 // pred_check_branch
      %52 = sbr.rel (0) target = $region21
    $region20: #{tpu_custom_call.1} parent=1 // pred_region
      _
    $region21: #{tpu_custom_call.1} parent=1 // pred_fallthru
      _
    // Predicated region
    $region22: #{tpu_custom_call.1} parent=1 // pred_check
      _
    $region23: #{tpu_custom_call.1} parent=1 // pred_check_branch
      %54 = sbr.rel (0) target = $region25
    $region24: #{tpu_custom_call.1} parent=1 // pred_region
      %55 = dma.done [#allocation3], 256
    $region25: #{tpu_custom_call.1} parent=1 // pred_fallthru
      _
    // Predicated region
    $region26: #{tpu_custom_call.1} parent=1 // pred_check
      _
    $region27: #{tpu_custom_call.1} parent=1 // pred_check_branch
      %57 = sbr.rel (0) target = $region29
    $region28: #{tpu_custom_call.1} parent=1 // pred_region
      %58 = dma.done [#allocation6], 1600
    $region29: #{tpu_custom_call.1} parent=1 // pred_fallthru
      _
    // Predicated region
    $region30: #{tpu_custom_call.1} parent=1 // pred_check
      _
    $region31: #{tpu_custom_call.1} parent=1 // pred_check_branch
      %60 = sbr.rel (0) target = $region33
    $region32: #{tpu_custom_call.1} parent=1 // pred_region
      %61 = dma.done [#allocation6], 1024
    $region33: #{tpu_custom_call.1} parent=1 // pred_fallthru
      _
    %v63 = vld [vmem:[#allocation2] sm:$0xf]
    %v64 = vld [vmem:[#allocation2 + $0x4] sm:$0xf]
    %v65 = vld [vmem:[#allocation2 + $0x8] sm:$0xf]
    %v66 = vld [vmem:[#allocation2 + $0xc] sm:$0xf]
    %v71 = vcombine.low %v63, %v64
    %v72 = vcombine.low %v65, %v66
    %v74 = vunpack.c.l.s4 1983009808
    %v75 = vunpack.c.0.s8 %v74
    %v76 = vlaneseq
    %v77 = vshrl.u32 %v76, 7
    %v78 = vsub.s32 %v75, %v77
    %v79 = vrot.slane %v71, %v78
    %v81 = vunpack.c.l.s4 1983009808
    %v82 = vunpack.c.0.s8 %v81
    %v83 = vlaneseq
    %v84 = vshrl.u32 %v83, 7
    %v85 = vsub.s32 %v82, %v84
    %v86 = vrot.slane %v72, %v85
    %v87 = vcombine.low %v79, %v86
    %v88 = vcombine.high %v79, %v86
    %v91 = vpack.c.bf16 %v87, %v87
    %v92 = vpack.c.bf16 %v88, %v88
    %v93 = vld [vmem:[#allocation5] sm:$0xf]
    %v94 = vld [vmem:[#allocation5 + $0x4] sm:$0xf]
    %v95 = vld [vmem:[#allocation5 + $0x8] sm:$0xf]
    %v96 = vld [vmem:[#allocation5 + $0xc] sm:$0xf]
    %v97 = vld [vmem:[#allocation5 + $0x10] sm:$0xf]
    %v98 = vld [vmem:[#allocation5 + $0x14] sm:$0xf]
    %v99 = vld [vmem:[#allocation5 + $0x18] sm:$0xf]
    %v100 = vld [vmem:[#allocation5 + $0x1c] sm:$0xf]
    %v101 = vld [vmem:[#allocation5 + $0x20] sm:$0xf]
    %v102 = vld [vmem:[#allocation5 + $0x24] sm:$0xf]
    %v103 = vld [vmem:[#allocation5 + $0x28] sm:$0xf]
    %v104 = vld [vmem:[#allocation5 + $0x2c] sm:$0xf]
    %v105 = vld [vmem:[#allocation5 + $0x30] sm:$0xf]
    %v106 = vld [vmem:[#allocation5 + $0x34] sm:$0xf]
    %v107 = vld [vmem:[#allocation5 + $0x38] sm:$0xf]
    %v108 = vld [vmem:[#allocation5 + $0x3c] sm:$0xf]
    %v109 = vld [vmem:[#allocation5 + $0x40] sm:$0xf]
    %v110 = vld [vmem:[#allocation5 + $0x44] sm:$0xf]
    %v111 = vld [vmem:[#allocation5 + $0x48] sm:$0xf]
    %v112 = vld [vmem:[#allocation5 + $0x4c] sm:$0xf]
    %v113 = vld [vmem:[#allocation5 + $0x50] sm:$0xf]
    %v114 = vld [vmem:[#allocation5 + $0x54] sm:$0xf]
    %v115 = vld [vmem:[#allocation5 + $0x58] sm:$0xf]
    %v116 = vld [vmem:[#allocation5 + $0x5c] sm:$0xf]
    %v117 = vld [vmem:[#allocation5 + $0x60] sm:$0xf]
    %v118 = vld [vmem:[%s2] sm:$0x1]
    %v120 = vlaneseq
    %v121 = vshrl.u32 %v120, 7
    %v122 = vsub.s32 0, %v121
    %v123 = vrot.slane %v118, %v122
    %v150 = vunpack.c.l.b16 %v93
    %v151 = vunpack.c.l.b16 %v94
    %v152 = vunpack.c.l.b16 %v95
    %v153 = vunpack.c.l.b16 %v96
    %v154 = vunpack.c.l.b16 %v97
    %v155 = vunpack.c.l.b16 %v98
    %v156 = vunpack.c.l.b16 %v99
    %v157 = vunpack.c.l.b16 %v100
    %v158 = vunpack.c.l.b16 %v101
    %v159 = vunpack.c.l.b16 %v102
    %v160 = vunpack.c.l.b16 %v103
    %v161 = vunpack.c.l.b16 %v104
    %v162 = vunpack.c.l.b16 %v105
    %v163 = vunpack.c.l.b16 %v106
    %v164 = vunpack.c.l.b16 %v107
    %v165 = vunpack.c.l.b16 %v108
    %v166 = vunpack.c.l.b16 %v109
    %v167 = vunpack.c.l.b16 %v110
    %v168 = vunpack.c.l.b16 %v111
    %v169 = vunpack.c.l.b16 %v112
    %v170 = vunpack.c.l.b16 %v113
    %v171 = vunpack.c.l.b16 %v114
    %v172 = vunpack.c.l.b16 %v115
    %v173 = vunpack.c.l.b16 %v116
    %v174 = vunpack.c.l.b16 %v117
    %v175 = vpack.c.b16 %v151, %v150
    %v176 = vpack.c.b16 %v153, %v152
    %v177 = vpack.c.b16 %v155, %v154
    %v178 = vpack.c.b16 %v157, %v156
    %v179 = vpack.c.b16 %v159, %v158
    %v180 = vpack.c.b16 %v161, %v160
    %v181 = vpack.c.b16 %v163, %v162
    %v182 = vpack.c.b16 %v165, %v164
    %v183 = vpack.c.b16 %v167, %v166
    %v184 = vpack.c.b16 %v169, %v168
    %v185 = vpack.c.b16 %v171, %v170
    %v186 = vpack.c.b16 %v173, %v172
    %v187 = vpack.c.b16 %v174, %v174
    %vm200 = vcmask 588800
    %v202 = vsel %vm200, %v92, 0
    %vm204 = vcmask 1043456
    %v206 = vsel %vm204, %v187, 0
    %208 = vmatprep.subr.bf16.mxu0 0
    %209 = vmatpush1.bf16.msra.mxu0 %v182
    %210 = vmatprep.subr.bf16.mxu0 0
    %211 = vmatpush1.bf16.msra.mxu0 %v181
    %212 = vmatprep.subr.bf16.mxu0 0
    %213 = vmatpush1.bf16.msra.mxu0 %v180
    %214 = vmatprep.subr.bf16.mxu0 0
    %215 = vmatpush1.bf16.msra.mxu0 %v179
    %216 = vmatprep.subr.bf16.mxu0 0
    %217 = vmatpush1.bf16.msra.mxu0 %v178
    %218 = vmatprep.subr.bf16.mxu0 0
    %219 = vmatpush1.bf16.msra.mxu0 %v177
    %220 = vmatprep.subr.bf16.mxu0 0
    %221 = vmatpush1.bf16.msra.mxu0 %v176
    %222 = vmatprep.subr.bf16.mxu0 0
    %223 = vmatpush1.bf16.msra.mxu0 %v175
    %224 = vmatprep.subr.bf16.mxu0 0
    %225 = vmatpush2.bf16.msra.mxu0 0
    %226 = vmatprep.subr.bf16.mxu0 0
    %227 = vmatpush2.bf16.msra.mxu0 0
    %228 = vmatprep.subr.bf16.mxu0 0
    %229 = vmatpush2.bf16.msra.mxu0 0
    %230 = vmatprep.subr.bf16.mxu0 0
    %231 = vmatpush2.bf16.msra.mxu0 %v206
    %232 = vmatprep.subr.bf16.mxu0 0
    %233 = vmatpush2.bf16.msra.mxu0 %v186
    %234 = vmatprep.subr.bf16.mxu0 0
    %235 = vmatpush2.bf16.msra.mxu0 %v185
    %236 = vmatprep.subr.bf16.mxu0 0
    %237 = vmatpush2.bf16.msra.mxu0 %v184
    %238 = vmatprep.subr.bf16.mxu0 0
    %239 = vmatpush2.bf16.msra.mxu0 %v183
    %240 = vmatprep.mubr.bf16.mxu0 %v202
    %241 = vmatmul.mubr.bf16.gmra.mxu0 %v91
    %v242 = vpop.f32.mrf.mxu0
    %v243 = vadd.f32 %v123, %v242
    %v244 = vpop.f32.mrf.mxu0
    %v245 = vpop.f32.mrf.mxu0
    %v246 = vpop.f32.mrf.mxu0
    %247 = vdwg.mxu0
    %v248 = vmax.f32 %v243, 0.0
    %v249 = vpack.c.bf16 %v248, %v248
    %v250 = vld [vmem:[#allocation7] sm:$0xf]
    %v251 = vld [vmem:[#allocation7 + $0x4] sm:$0xf]
    %v252 = vld [vmem:[#allocation7 + $0x8] sm:$0xf]
    %v253 = vld [vmem:[#allocation7 + $0xc] sm:$0xf]
    %v254 = vld [vmem:[#allocation7 + $0x10] sm:$0xf]
    %v255 = vld [vmem:[#allocation7 + $0x14] sm:$0xf]
    %v256 = vld [vmem:[#allocation7 + $0x18] sm:$0xf]
    %v257 = vld [vmem:[#allocation7 + $0x1c] sm:$0xf]
    %v258 = vld [vmem:[#allocation7 + $0x20] sm:$0xf]
    %v259 = vld [vmem:[#allocation7 + $0x24] sm:$0xf]
    %v260 = vld [vmem:[#allocation7 + $0x28] sm:$0xf]
    %v261 = vld [vmem:[#allocation7 + $0x2c] sm:$0xf]
    %v262 = vld [vmem:[#allocation7 + $0x30] sm:$0xf]
    %v263 = vld [vmem:[#allocation7 + $0x34] sm:$0xf]
    %v264 = vld [vmem:[#allocation7 + $0x38] sm:$0xf]
    %v265 = vld [vmem:[#allocation7 + $0x3c] sm:$0xf]
    %v282 = vunpack.c.l.b16 %v250
    %v283 = vunpack.c.l.b16 %v251
    %v284 = vunpack.c.l.b16 %v252
    %v285 = vunpack.c.l.b16 %v253
    %v286 = vunpack.c.l.b16 %v254
    %v287 = vunpack.c.l.b16 %v255
    %v288 = vunpack.c.l.b16 %v256
    %v289 = vunpack.c.l.b16 %v257
    %v290 = vunpack.c.l.b16 %v258
    %v291 = vunpack.c.l.b16 %v259
    %v292 = vunpack.c.l.b16 %v260
    %v293 = vunpack.c.l.b16 %v261
    %v294 = vunpack.c.l.b16 %v262
    %v295 = vunpack.c.l.b16 %v263
    %v296 = vunpack.c.l.b16 %v264
    %v297 = vunpack.c.l.b16 %v265
    %v298 = vpack.c.b16 %v283, %v282
    %v299 = vpack.c.b16 %v285, %v284
    %v300 = vpack.c.b16 %v287, %v286
    %v301 = vpack.c.b16 %v289, %v288
    %v302 = vpack.c.b16 %v291, %v290
    %v303 = vpack.c.b16 %v293, %v292
    %v304 = vpack.c.b16 %v295, %v294
    %v305 = vpack.c.b16 %v297, %v296
    %314 = vmatprep.subr.bf16.mxu0 0
    %315 = vmatpush1.bf16.msra.mxu0 %v305
    %316 = vmatprep.subr.bf16.mxu0 0
    %317 = vmatpush1.bf16.msra.mxu0 %v304
    %318 = vmatprep.subr.bf16.mxu0 0
    %319 = vmatpush1.bf16.msra.mxu0 %v303
    %320 = vmatprep.subr.bf16.mxu0 0
    %321 = vmatpush1.bf16.msra.mxu0 %v302
    %322 = vmatprep.subr.bf16.mxu0 0
    %323 = vmatpush1.bf16.msra.mxu0 %v301
    %324 = vmatprep.subr.bf16.mxu0 0
    %325 = vmatpush1.bf16.msra.mxu0 %v300
    %326 = vmatprep.subr.bf16.mxu0 0
    %327 = vmatpush1.bf16.msra.mxu0 %v299
    %328 = vmatprep.subr.bf16.mxu0 0
    %329 = vmatpush1.bf16.msra.mxu0 %v298
    %330 = vmatprep.subr.bf16.mxu0 0
    %331 = vmatpush2.bf16.msra.mxu0 0
    %332 = vmatprep.subr.bf16.mxu0 0
    %333 = vmatpush2.bf16.msra.mxu0 0
    %334 = vmatprep.subr.bf16.mxu0 0
    %335 = vmatpush2.bf16.msra.mxu0 0
    %336 = vmatprep.subr.bf16.mxu0 0
    %337 = vmatpush2.bf16.msra.mxu0 0
    %338 = vmatprep.subr.bf16.mxu0 0
    %339 = vmatpush2.bf16.msra.mxu0 0
    %340 = vmatprep.subr.bf16.mxu0 0
    %341 = vmatpush2.bf16.msra.mxu0 0
    %342 = vmatprep.subr.bf16.mxu0 0
    %343 = vmatpush2.bf16.msra.mxu0 0
    %344 = vmatprep.subr.bf16.mxu0 0
    %345 = vmatpush2.bf16.msra.mxu0 0
    %346 = vmatprep.mubr.bf16.mxu0 0
    %347 = vmatmul.mubr.bf16.gmra.mxu0 %v249
    %v348 = vpop.f32.mrf.mxu0
    %v349 = vadd.f32 0.0, %v348
    %v350 = vpop.f32.mrf.mxu0
    %v351 = vpop.f32.mrf.mxu0
    %v352 = vpop.f32.mrf.mxu0
    %353 = vdwg.mxu0
    %v354 = vld [vmem:[%s4] sm:$0x1]
    %v356 = vlaneseq
    %v357 = vshrl.u32 %v356, 7
    %v358 = vsub.s32 0, %v357
    %v359 = vrot.slane %v354, %v358
    %v361 = vadd.f32 %v349, %v359
    %vm362 = vcmask 56320
    %v363 = vsel %vm362, %v361, -inf
    %364 = vmax.xlane.f32.xlu0 %v363
    %v365 = vpop.xlane.xlu0 %364
    %v366 = vsub.f32 %v361, %v365
    %v367 = vmul.f32 %v366, 1.442695
    %v368 = vpow.pop %v367
    %v369 = vsel %vm362, %v368, 0.0
    %370 = vadd.xlane.f32.xlu0 %v369
    %v371 = vpop.xlane.xlu0 %370
    %v372 = vrcp.pop %v371
    %v373 = vmul.f32 %v368, %v372
    %374 = vst.msk [vmem:[#allocation8] sm:$0xff] %vm362, %v373
    // Predicated region
    $region34: #{tpu_custom_call.1} parent=1 // pred_check
      _
    $region35: #{tpu_custom_call.1} parent=1 // pred_check_branch
      %376 = sbr.rel (0) target = $region37
    $region36: #{tpu_custom_call.1} parent=1 // pred_region
      %s378 = ssub.s32 128, 32
      %379 = vsyncadd [#allocation4], %s378
      %s380 = sshll.u32 [#allocation8], 4
      %s381 = int_to_ptr.vmem [resolvable:$true] %s380
      %386 = dma.vmem_to_hbm [thread:$0]  %s381, 32, %s5, [#allocation4], 32, 32, 2
    $region37: #{tpu_custom_call.1} parent=1 // pred_fallthru
      _
    // Predicated region
    $region38: #{tpu_custom_call.1} parent=1 // pred_check
      _
    $region39: #{tpu_custom_call.1} parent=1 // pred_check_branch
      %388 = sbr.rel (0) target = $region41
    $region40: #{tpu_custom_call.1} parent=1 // pred_region
      %389 = dma.done [#allocation4], 128
    $region41: #{tpu_custom_call.1} parent=1 // pred_fallthru
      _
    %390 = vsyncpa [#allocation3], 1
    %391 = vsyncpa [#allocation6], 1
    %392 = vsyncpa [#allocation4], 1

</llo_original>
